<compile_context>
chip_gen: v5e
topology: v5e:2x2
jax: 0.10.0
libtpu: 0.0.40
codegen_flags: <defaults>
</compile_context>

<pallas_src>
import jax
import jax.numpy as jnp
from jax import lax
from jax.experimental import pallas as pl
from jax.experimental.pallas import tpu as pltpu


def _downsample_kernel(l_ref, x_ref, o_ref, xb_ref):
    """One (batch, output-row-band) step of fused 3x3 conv + PixelUnshuffle(2).

    l_ref : (3, Cout*Hb, Cin*Hp) bf16  per-kw matrices folding conv weights,
                                       kh row shift and the row unshuffle.
    x_ref : (1, Cin, H, W)             full NCHW image (W in the lane axis).
    o_ref : (1, 4*Cout, bh2, W2)       unshuffled NCHW output row band.
    xb_ref: (Cin*Hp, W) bf16 scratch   channel-stacked input band + 1-row halo.
    """
    cin, h, w = x_ref.shape[1], x_ref.shape[2], x_ref.shape[3]
    cout = o_ref.shape[1] // 4
    bh2, w2 = o_ref.shape[2], o_ref.shape[3]
    hb = 2 * bh2          # conv rows produced by this band
    hp = hb + 2           # conv rows consumed (+1 halo row top/bottom)

    t = pl.program_id(1)
    last_band = pl.num_programs(1) - 1
    r0 = pl.multiple_of(t * hb, hb)          # first conv row of this band

    # ---- 1. Stage the haloed band into VMEM scratch (bf16), channels stacked
    #         along sublanes: xb[ci*hp + r, :] = x[ci, r0 - 1 + r, :], with the
    #         'same'-padding zero rows materialized only at the image border.
    zero_row = jnp.zeros((1, w), jnp.bfloat16)
    top_src = jnp.maximum(r0 - 1, 0)
    bot_src = jnp.minimum(r0 + hb, h - 1)
    for ci in range(cin):
        base = ci * hp
        top = x_ref[0, ci, pl.ds(top_src, 1), :].astype(jnp.bfloat16)
        xb_ref[pl.ds(base, 1), :] = jnp.where(t > 0, top, zero_row)
        xb_ref[pl.ds(base + 1, hb), :] = (
            x_ref[0, ci, pl.ds(r0, hb), :].astype(jnp.bfloat16))
        bot = x_ref[0, ci, pl.ds(bot_src, 1), :].astype(jnp.bfloat16)
        xb_ref[pl.ds(base + 1 + hb, 1), :] = jnp.where(t < last_band, bot,
                                                       zero_row)

    xb = xb_ref[...]                         # (Cin*Hp, W) bf16

    # ---- 2. Column shift + column half of the unshuffle: one bf16 MXU matmul
    #         per kw over the whole channel-stacked band.  The 0/1 matrix is
    #         regenerated from iota each step (exact in bf16), so it is never
    #         an HBM input and never double-buffered.
    col = lax.broadcasted_iota(jnp.int32, (w, w), 1)   # output column w'
    row = lax.broadcasted_iota(jnp.int32, (w, w), 0)   # source column
    sc = jnp.where(col < w2, 2 * col, 2 * (col - w2) + 1)

    acc = jnp.zeros((cout * hb, w), jnp.float32)
    for kw in range(3):
        src = sc + (kw - 1)
        bu = jnp.where((row == src) & (src >= 0) & (src < w),
                       1.0, 0.0).astype(jnp.bfloat16)
        tb = jnp.dot(xb, bu,
                     preferred_element_type=jnp.float32).astype(jnp.bfloat16)
        # ---- 3. Cin->Cout contraction + kh shift + row unshuffle on the MXU:
        #         bf16 x bf16 matmul, f32 accumulation, kh sum inside K.
        acc = acc + jnp.dot(l_ref[kw], tb,
                            preferred_element_type=jnp.float32)

    # ---- 4. Stores: the four unshuffle phases are contiguous quadrants of
    #         acc (lane-aligned whenever W2 is a multiple of 128).
    for co in range(cout):
        for i in range(2):
            rows = acc[co * hb + i * bh2: co * hb + (i + 1) * bh2, :]
            for j in range(2):
                o_ref[0, co * 4 + i * 2 + j, :, :] = (
                    rows[:, j * w2:(j + 1) * w2].astype(o_ref.dtype))


def _build_l_matrices(wts, bh2):
    """(3, Cout*Hb, Cin*Hp) bf16: per kw, fold the conv weights, the kh row
    shift (with 'same' zero padding handled by the zero halo rows) and the
    row half of PixelUnshuffle(2).  Each entry is exactly one weight or 0,
    so bf16 only rounds the weights themselves."""
    cout, cin = wts.shape[0], wts.shape[1]
    hb = 2 * bh2
    hp = hb + 2
    q = jnp.arange(hb)
    # conv row (local to the band) feeding unshuffled output row q
    rb = jnp.where(q < bh2, 2 * q, 2 * (q - bh2) + 1)               # (Hb,)
    kh = jnp.arange(3)
    r = jnp.arange(hp)
    # sel[kh, q, r] = 1 iff band-buffer row r (stored with +1 halo offset)
    # is the conv input row for output row q through tap kh.
    sel = (r[None, None, :] ==
           (rb[None, :, None] + kh[:, None, None])).astype(jnp.float32)
    l = jnp.einsum('oiyx,yqr->xoqir', wts.astype(jnp.float32), sel)
    return l.reshape(3, cout * hb, cin * hp).astype(jnp.bfloat16)


@jax.jit
def downsample_forward(x, weights):
    """Equivalent of Downsample.forward.
    x: (B, n_feat, H, W) NCHW; weights: (n_feat//2, n_feat, 3, 3) OIHW.
    Returns (B, 2*n_feat, H//2, W//2)."""
    b, cin, h, w = x.shape
    cout = weights.shape[0]
    assert weights.shape == (cout, cin, 3, 3)
    assert h % 2 == 0 and w % 2 == 0
    h2, w2 = h // 2, w // 2

    # Output-row band: 8 unshuffled rows (16 conv rows) when that divides H/2
    # (keeps the out BlockSpec 8-sublane aligned and the L matrices small);
    # otherwise a single band.
    bh2 = 8 if h2 % 8 == 0 else h2
    n_bands = h2 // bh2
    hb, hp = 2 * bh2, 2 * bh2 + 2

    l = _build_l_matrices(weights, bh2)          # (3, Cout*Hb, Cin*Hp) bf16

    flops = b * n_bands * (6 * cin * hp * w * w
                           + 6 * cout * hb * cin * hp * w)
    bytes_accessed = (x.size * x.dtype.itemsize
                      + b * 4 * cout * h2 * w2 * x.dtype.itemsize
                      + l.size * 2)

    return pl.pallas_call(
        _downsample_kernel,
        out_shape=jax.ShapeDtypeStruct((b, 4 * cout, h2, w2), x.dtype),
        grid_spec=pltpu.PrefetchScalarGridSpec(
            num_scalar_prefetch=0,
            grid=(b, n_bands),
            in_specs=[
                pl.BlockSpec((3, cout * hb, cin * hp),
                             lambda bi, t: (0, 0, 0)),        # folded weights
                pl.BlockSpec((1, cin, h, w),
                             lambda bi, t: (bi, 0, 0, 0)),    # full image
            ],
            out_specs=pl.BlockSpec((1, 4 * cout, bh2, w2),
                                   lambda bi, t: (bi, 0, t, 0)),
            scratch_shapes=[pltpu.VMEM((cin * hp, w), jnp.bfloat16)],
        ),
        compiler_params=pltpu.CompilerParams(
            dimension_semantics=("parallel", "parallel"),
            vmem_limit_bytes=32 * 1024 * 1024),
        cost_estimate=pl.CostEstimate(flops=flops, transcendentals=0,
                                      bytes_accessed=bytes_accessed),
    )(l, x)


if __name__ == "__main__":
    def reference(x, wts):
        conv = lax.conv_general_dilated(
            x, wts, window_strides=(1, 1), padding=((1, 1), (1, 1)),
            dimension_numbers=("NCHW", "OIHW", "NCHW"),
            precision=lax.Precision.HIGHEST)
        bb, cc, hh, ww = conv.shape
        r = conv.reshape(bb, cc, hh // 2, 2, ww // 2, 2)
        return jnp.transpose(r, (0, 1, 3, 5, 2, 4)).reshape(
            bb, 4 * cc, hh // 2, ww // 2)

    key = jax.random.PRNGKey(0)
    k1, k2, k3, k4 = jax.random.split(key, 4)

    configs = [
        # (B, n_feat, H, W, key_x, key_w)
        (2, 4, 16, 16, k1, k2),     # spec-sized small config (single band)
        (1, 8, 32, 32, k3, k4),     # exercises multi-band row tiling
    ]
    for bsz, n_feat, hh, ww, kx, kw_ in configs:
        x = jax.random.normal(kx, (bsz, n_feat, hh, ww), dtype=jnp.float32)
        wts = jax.random.normal(kw_, (n_feat // 2, n_feat, 3, 3),
                                dtype=jnp.float32) * 0.1

        out = jax.block_until_ready(downsample_forward(x, wts))
        assert out.shape == (bsz, 2 * n_feat, hh // 2, ww // 2), out.shape

        # Structural check: kernel == conv of bf16-rounded operands with f32
        # accumulation (should match to summation-order noise).
        ref_bf16 = reference(x.astype(jnp.bfloat16).astype(jnp.float32),
                             wts.astype(jnp.bfloat16).astype(jnp.float32))
        err_s = float(jnp.max(jnp.abs(out - ref_bf16)))
        assert jnp.allclose(out, ref_bf16, atol=1e-4, rtol=1e-4), err_s

        # End-to-end check vs. the full-f32 reference; headroom covers the
        # bf16 rounding of x and w on the MXU (structural errors are O(0.1-1)).
        ref_f32 = reference(x, wts)
        err_f = float(jnp.max(jnp.abs(out - ref_f32)))
        assert jnp.allclose(out, ref_f32, atol=2e-2, rtol=2e-2), err_f

    print("KERNEL_OK")
</pallas_src>

<mosaic_0001>
module attributes {stable_mosaic.version = 11 : i64} {
  func.func @_downsample_kernel(%arg0: i32, %arg1: i32, %arg2: memref<3x32x72xbf16, #tpu.memory_space<vmem>>, %arg3: memref<1x4x16x16xf32, #tpu.memory_space<vmem>>, %arg4: memref<1x8x8x8xf32, #tpu.memory_space<vmem>>, %arg5: memref<72x16xbf16, #tpu.memory_space<vmem>>) attributes {dimension_semantics = [#tpu.dimension_semantics<parallel>, #tpu.dimension_semantics<parallel>], iteration_bounds = array<i64: 2, 1>, scalar_prefetch = 0 : i64, scratch_operands = 1 : i64, tpu.core_type = #tpu.core_type<tc>, window_params = [{pipeline_mode = #tpu.pipeline_mode<synchronous>, transform_indices = @transform_0, window_bounds = array<i64: 3, 32, 72>}, {transform_indices = @transform_1, window_bounds = array<i64: 1, 4, 16, 16>}, {transform_indices = @transform_2, window_bounds = array<i64: 1, 8, 8, 8>}]} {
    %c16_i32 = arith.constant 16 : i32
    %0 = arith.muli %arg1, %c16_i32 : i32
    %1 = tpu.assume_multiple %0, 16 : i32
    %cst = arith.constant 0.000000e+00 : bf16
    %2 = vector.broadcast %cst : bf16 to vector<1x16xbf16>
    %c1_i32 = arith.constant 1 : i32
    %3 = arith.subi %1, %c1_i32 : i32
    %c0_i32 = arith.constant 0 : i32
    %4 = arith.maxsi %3, %c0_i32 : i32
    %c16_i32_0 = arith.constant 16 : i32
    %5 = arith.addi %1, %c16_i32_0 : i32
    %c15_i32 = arith.constant 15 : i32
    %6 = arith.minsi %5, %c15_i32 : i32
    %c0 = arith.constant 0 : index
    %c0_1 = arith.constant 0 : index
    %7 = arith.index_cast %4 : i32 to index
    %c0_2 = arith.constant 0 : index
    %8 = vector.load %arg3[%c0, %c0_1, %7, %c0_2] : memref<1x4x16x16xf32, #tpu.memory_space<vmem>>, vector<1x1x1x16xf32>
    %9 = vector.shape_cast %8 : vector<1x1x1x16xf32> to vector<1x16xf32>
    %10 = arith.truncf %9 : vector<1x16xf32> to vector<1x16xbf16>
    %c0_i32_3 = arith.constant 0 : i32
    %11 = arith.cmpi sgt, %arg1, %c0_i32_3 : i32
    %12 = arith.select %11, %10, %2 : vector<1x16xbf16>
    %c0_4 = arith.constant 0 : index
    %c0_5 = arith.constant 0 : index
    %13 = vector.load %arg5[%c0_4, %c0_5] : memref<72x16xbf16, #tpu.memory_space<vmem>>, vector<1x16xbf16>
    tpu.vector_store %arg5[%c0_4, %c0_5], %12 {strides = array<i32>} : memref<72x16xbf16, #tpu.memory_space<vmem>>, vector<1x16xbf16>,
    %c0_6 = arith.constant 0 : index
    %c0_7 = arith.constant 0 : index
    %14 = arith.index_cast %1 : i32 to index
    %c0_8 = arith.constant 0 : index
    %15 = vector.load %arg3[%c0_6, %c0_7, %14, %c0_8] : memref<1x4x16x16xf32, #tpu.memory_space<vmem>>, vector<1x1x16x16xf32>
    %16 = vector.shape_cast %15 : vector<1x1x16x16xf32> to vector<16x16xf32>
    %17 = arith.truncf %16 : vector<16x16xf32> to vector<16x16xbf16>
    %c1 = arith.constant 1 : index
    %c0_9 = arith.constant 0 : index
    %18 = vector.load %arg5[%c1, %c0_9] : memref<72x16xbf16, #tpu.memory_space<vmem>>, vector<16x16xbf16>
    tpu.vector_store %arg5[%c1, %c0_9], %17 {strides = array<i32>} : memref<72x16xbf16, #tpu.memory_space<vmem>>, vector<16x16xbf16>,
    %c0_10 = arith.constant 0 : index
    %c0_11 = arith.constant 0 : index
    %19 = arith.index_cast %6 : i32 to index
    %c0_12 = arith.constant 0 : index
    %20 = vector.load %arg3[%c0_10, %c0_11, %19, %c0_12] : memref<1x4x16x16xf32, #tpu.memory_space<vmem>>, vector<1x1x1x16xf32>
    %21 = vector.shape_cast %20 : vector<1x1x1x16xf32> to vector<1x16xf32>
    %22 = arith.truncf %21 : vector<1x16xf32> to vector<1x16xbf16>
    %c0_i32_13 = arith.constant 0 : i32
    %23 = arith.cmpi slt, %arg1, %c0_i32_13 : i32
    %24 = arith.select %23, %22, %2 : vector<1x16xbf16>
    %c17 = arith.constant 17 : index
    %c0_14 = arith.constant 0 : index
    %25 = vector.load %arg5[%c17, %c0_14] : memref<72x16xbf16, #tpu.memory_space<vmem>>, vector<1x16xbf16>
    tpu.vector_store %arg5[%c17, %c0_14], %24 {strides = array<i32>} : memref<72x16xbf16, #tpu.memory_space<vmem>>, vector<1x16xbf16>,
    %c0_15 = arith.constant 0 : index
    %c1_16 = arith.constant 1 : index
    %26 = arith.index_cast %4 : i32 to index
    %c0_17 = arith.constant 0 : index
    %27 = vector.load %arg3[%c0_15, %c1_16, %26, %c0_17] : memref<1x4x16x16xf32, #tpu.memory_space<vmem>>, vector<1x1x1x16xf32>
    %28 = vector.shape_cast %27 : vector<1x1x1x16xf32> to vector<1x16xf32>
    %29 = arith.truncf %28 : vector<1x16xf32> to vector<1x16xbf16>
    %c0_i32_18 = arith.constant 0 : i32
    %30 = arith.cmpi sgt, %arg1, %c0_i32_18 : i32
    %31 = arith.select %30, %29, %2 : vector<1x16xbf16>
    %c18 = arith.constant 18 : index
    %c0_19 = arith.constant 0 : index
    %32 = vector.load %arg5[%c18, %c0_19] : memref<72x16xbf16, #tpu.memory_space<vmem>>, vector<1x16xbf16>
    tpu.vector_store %arg5[%c18, %c0_19], %31 {strides = array<i32>} : memref<72x16xbf16, #tpu.memory_space<vmem>>, vector<1x16xbf16>,
    %c0_20 = arith.constant 0 : index
    %c1_21 = arith.constant 1 : index
    %33 = arith.index_cast %1 : i32 to index
    %c0_22 = arith.constant 0 : index
    %34 = vector.load %arg3[%c0_20, %c1_21, %33, %c0_22] : memref<1x4x16x16xf32, #tpu.memory_space<vmem>>, vector<1x1x16x16xf32>
    %35 = vector.shape_cast %34 : vector<1x1x16x16xf32> to vector<16x16xf32>
    %36 = arith.truncf %35 : vector<16x16xf32> to vector<16x16xbf16>
    %c19 = arith.constant 19 : index
    %c0_23 = arith.constant 0 : index
    %37 = vector.load %arg5[%c19, %c0_23] : memref<72x16xbf16, #tpu.memory_space<vmem>>, vector<16x16xbf16>
    tpu.vector_store %arg5[%c19, %c0_23], %36 {strides = array<i32>} : memref<72x16xbf16, #tpu.memory_space<vmem>>, vector<16x16xbf16>,
    %c0_24 = arith.constant 0 : index
    %c1_25 = arith.constant 1 : index
    %38 = arith.index_cast %6 : i32 to index
    %c0_26 = arith.constant 0 : index
    %39 = vector.load %arg3[%c0_24, %c1_25, %38, %c0_26] : memref<1x4x16x16xf32, #tpu.memory_space<vmem>>, vector<1x1x1x16xf32>
    %40 = vector.shape_cast %39 : vector<1x1x1x16xf32> to vector<1x16xf32>
    %41 = arith.truncf %40 : vector<1x16xf32> to vector<1x16xbf16>
    %c0_i32_27 = arith.constant 0 : i32
    %42 = arith.cmpi slt, %arg1, %c0_i32_27 : i32
    %43 = arith.select %42, %41, %2 : vector<1x16xbf16>
    %c35 = arith.constant 35 : index
    %c0_28 = arith.constant 0 : index
    %44 = vector.load %arg5[%c35, %c0_28] : memref<72x16xbf16, #tpu.memory_space<vmem>>, vector<1x16xbf16>
    tpu.vector_store %arg5[%c35, %c0_28], %43 {strides = array<i32>} : memref<72x16xbf16, #tpu.memory_space<vmem>>, vector<1x16xbf16>,
    %c0_29 = arith.constant 0 : index
    %c2 = arith.constant 2 : index
    %45 = arith.index_cast %4 : i32 to index
    %c0_30 = arith.constant 0 : index
    %46 = vector.load %arg3[%c0_29, %c2, %45, %c0_30] : memref<1x4x16x16xf32, #tpu.memory_space<vmem>>, vector<1x1x1x16xf32>
    %47 = vector.shape_cast %46 : vector<1x1x1x16xf32> to vector<1x16xf32>
    %48 = arith.truncf %47 : vector<1x16xf32> to vector<1x16xbf16>
    %c0_i32_31 = arith.constant 0 : i32
    %49 = arith.cmpi sgt, %arg1, %c0_i32_31 : i32
    %50 = arith.select %49, %48, %2 : vector<1x16xbf16>
    %c36 = arith.constant 36 : index
    %c0_32 = arith.constant 0 : index
    %51 = vector.load %arg5[%c36, %c0_32] : memref<72x16xbf16, #tpu.memory_space<vmem>>, vector<1x16xbf16>
    tpu.vector_store %arg5[%c36, %c0_32], %50 {strides = array<i32>} : memref<72x16xbf16, #tpu.memory_space<vmem>>, vector<1x16xbf16>,
    %c0_33 = arith.constant 0 : index
    %c2_34 = arith.constant 2 : index
    %52 = arith.index_cast %1 : i32 to index
    %c0_35 = arith.constant 0 : index
    %53 = vector.load %arg3[%c0_33, %c2_34, %52, %c0_35] : memref<1x4x16x16xf32, #tpu.memory_space<vmem>>, vector<1x1x16x16xf32>
    %54 = vector.shape_cast %53 : vector<1x1x16x16xf32> to vector<16x16xf32>
    %55 = arith.truncf %54 : vector<16x16xf32> to vector<16x16xbf16>
    %c37 = arith.constant 37 : index
    %c0_36 = arith.constant 0 : index
    %56 = vector.load %arg5[%c37, %c0_36] : memref<72x16xbf16, #tpu.memory_space<vmem>>, vector<16x16xbf16>
    tpu.vector_store %arg5[%c37, %c0_36], %55 {strides = array<i32>} : memref<72x16xbf16, #tpu.memory_space<vmem>>, vector<16x16xbf16>,
    %c0_37 = arith.constant 0 : index
    %c2_38 = arith.constant 2 : index
    %57 = arith.index_cast %6 : i32 to index
    %c0_39 = arith.constant 0 : index
    %58 = vector.load %arg3[%c0_37, %c2_38, %57, %c0_39] : memref<1x4x16x16xf32, #tpu.memory_space<vmem>>, vector<1x1x1x16xf32>
    %59 = vector.shape_cast %58 : vector<1x1x1x16xf32> to vector<1x16xf32>
    %60 = arith.truncf %59 : vector<1x16xf32> to vector<1x16xbf16>
    %c0_i32_40 = arith.constant 0 : i32
    %61 = arith.cmpi slt, %arg1, %c0_i32_40 : i32
    %62 = arith.select %61, %60, %2 : vector<1x16xbf16>
    %c53 = arith.constant 53 : index
    %c0_41 = arith.constant 0 : index
    %63 = vector.load %arg5[%c53, %c0_41] : memref<72x16xbf16, #tpu.memory_space<vmem>>, vector<1x16xbf16>
    tpu.vector_store %arg5[%c53, %c0_41], %62 {strides = array<i32>} : memref<72x16xbf16, #tpu.memory_space<vmem>>, vector<1x16xbf16>,
    %c0_42 = arith.constant 0 : index
    %c3 = arith.constant 3 : index
    %64 = arith.index_cast %4 : i32 to index
    %c0_43 = arith.constant 0 : index
    %65 = vector.load %arg3[%c0_42, %c3, %64, %c0_43] : memref<1x4x16x16xf32, #tpu.memory_space<vmem>>, vector<1x1x1x16xf32>
    %66 = vector.shape_cast %65 : vector<1x1x1x16xf32> to vector<1x16xf32>
    %67 = arith.truncf %66 : vector<1x16xf32> to vector<1x16xbf16>
    %c0_i32_44 = arith.constant 0 : i32
    %68 = arith.cmpi sgt, %arg1, %c0_i32_44 : i32
    %69 = arith.select %68, %67, %2 : vector<1x16xbf16>
    %c54 = arith.constant 54 : index
    %c0_45 = arith.constant 0 : index
    %70 = vector.load %arg5[%c54, %c0_45] : memref<72x16xbf16, #tpu.memory_space<vmem>>, vector<1x16xbf16>
    tpu.vector_store %arg5[%c54, %c0_45], %69 {strides = array<i32>} : memref<72x16xbf16, #tpu.memory_space<vmem>>, vector<1x16xbf16>,
    %c0_46 = arith.constant 0 : index
    %c3_47 = arith.constant 3 : index
    %71 = arith.index_cast %1 : i32 to index
    %c0_48 = arith.constant 0 : index
    %72 = vector.load %arg3[%c0_46, %c3_47, %71, %c0_48] : memref<1x4x16x16xf32, #tpu.memory_space<vmem>>, vector<1x1x16x16xf32>
    %73 = vector.shape_cast %72 : vector<1x1x16x16xf32> to vector<16x16xf32>
    %74 = arith.truncf %73 : vector<16x16xf32> to vector<16x16xbf16>
    %c55 = arith.constant 55 : index
    %c0_49 = arith.constant 0 : index
    %75 = vector.load %arg5[%c55, %c0_49] : memref<72x16xbf16, #tpu.memory_space<vmem>>, vector<16x16xbf16>
    tpu.vector_store %arg5[%c55, %c0_49], %74 {strides = array<i32>} : memref<72x16xbf16, #tpu.memory_space<vmem>>, vector<16x16xbf16>,
    %c0_50 = arith.constant 0 : index
    %c3_51 = arith.constant 3 : index
    %76 = arith.index_cast %6 : i32 to index
    %c0_52 = arith.constant 0 : index
    %77 = vector.load %arg3[%c0_50, %c3_51, %76, %c0_52] : memref<1x4x16x16xf32, #tpu.memory_space<vmem>>, vector<1x1x1x16xf32>
    %78 = vector.shape_cast %77 : vector<1x1x1x16xf32> to vector<1x16xf32>
    %79 = arith.truncf %78 : vector<1x16xf32> to vector<1x16xbf16>
    %c0_i32_53 = arith.constant 0 : i32
    %80 = arith.cmpi slt, %arg1, %c0_i32_53 : i32
    %81 = arith.select %80, %79, %2 : vector<1x16xbf16>
    %c71 = arith.constant 71 : index
    %c0_54 = arith.constant 0 : index
    %82 = vector.load %arg5[%c71, %c0_54] : memref<72x16xbf16, #tpu.memory_space<vmem>>, vector<1x16xbf16>
    tpu.vector_store %arg5[%c71, %c0_54], %81 {strides = array<i32>} : memref<72x16xbf16, #tpu.memory_space<vmem>>, vector<1x16xbf16>,
    %c0_55 = arith.constant 0 : index
    %c0_56 = arith.constant 0 : index
    %83 = vector.load %arg5[%c0_55, %c0_56] : memref<72x16xbf16, #tpu.memory_space<vmem>>, vector<72x16xbf16>
    %84 = tpu.iota {dimensions = array<i32: 1>} : vector<16x16xi32>
    %85 = tpu.iota {dimensions = array<i32: 0>} : vector<16x16xi32>
    %c8_i32 = arith.constant 8 : i32
    %86 = vector.broadcast %c8_i32 : i32 to vector<16x16xi32>
    %87 = arith.cmpi slt, %84, %86 : vector<16x16xi32>
    %c2_i32 = arith.constant 2 : i32
    %88 = vector.broadcast %c2_i32 : i32 to vector<16x16xi32>
    %89 = arith.muli %88, %84 : vector<16x16xi32>
    %c8_i32_57 = arith.constant 8 : i32
    %90 = vector.broadcast %c8_i32_57 : i32 to vector<16x16xi32>
    %91 = arith.subi %84, %90 : vector<16x16xi32>
    %c2_i32_58 = arith.constant 2 : i32
    %92 = vector.broadcast %c2_i32_58 : i32 to vector<16x16xi32>
    %93 = arith.muli %92, %91 : vector<16x16xi32>
    %c1_i32_59 = arith.constant 1 : i32
    %94 = vector.broadcast %c1_i32_59 : i32 to vector<16x16xi32>
    %95 = arith.addi %93, %94 : vector<16x16xi32>
    %96 = arith.select %87, %89, %95 : vector<16x16xi1>, vector<16x16xi32>
    %cst_60 = arith.constant 0.000000e+00 : f32
    %97 = vector.broadcast %cst_60 : f32 to vector<32x16xf32>
    %c-1_i32 = arith.constant -1 : i32
    %98 = vector.broadcast %c-1_i32 : i32 to vector<16x16xi32>
    %99 = arith.addi %96, %98 : vector<16x16xi32>
    %100 = arith.cmpi eq, %85, %99 : vector<16x16xi32>
    %c0_i32_61 = arith.constant 0 : i32
    %101 = vector.broadcast %c0_i32_61 : i32 to vector<16x16xi32>
    %102 = arith.cmpi sge, %99, %101 : vector<16x16xi32>
    %103 = arith.andi %100, %102 : vector<16x16xi1>
    %c16_i32_62 = arith.constant 16 : i32
    %104 = vector.broadcast %c16_i32_62 : i32 to vector<16x16xi32>
    %105 = arith.cmpi slt, %99, %104 : vector<16x16xi32>
    %106 = arith.andi %103, %105 : vector<16x16xi1>
    %cst_63 = arith.constant 1.000000e+00 : f32
    %cst_64 = arith.constant 0.000000e+00 : f32
    %107 = vector.broadcast %cst_63 : f32 to vector<16x16xf32>
    %108 = vector.broadcast %cst_64 : f32 to vector<16x16xf32>
    %109 = arith.select %106, %107, %108 : vector<16x16xi1>, vector<16x16xf32>
    %110 = arith.truncf %109 : vector<16x16xf32> to vector<16x16xbf16>
    %cst_65 = arith.constant dense<0.000000e+00> : vector<72x16xf32>
    %111 = tpu.matmul %83, %110, %cst_65 {dimension_numbers = #tpu.dot_dimension_numbers<[1], [0], [0], [1], [0, 0, 1, 1], [], []>} : vector<72x16xbf16>, vector<16x16xbf16>, vector<72x16xf32> -> vector<72x16xf32>
    %112 = arith.truncf %111 : vector<72x16xf32> to vector<72x16xbf16>
    %c0_66 = arith.constant 0 : index
    %c0_67 = arith.constant 0 : index
    %c0_68 = arith.constant 0 : index
    %113 = vector.load %arg2[%c0_66, %c0_67, %c0_68] : memref<3x32x72xbf16, #tpu.memory_space<vmem>>, vector<1x32x72xbf16>
    %114 = vector.shape_cast %113 : vector<1x32x72xbf16> to vector<32x72xbf16>
    %cst_69 = arith.constant dense<0.000000e+00> : vector<32x16xf32>
    %115 = tpu.matmul %114, %112, %cst_69 {dimension_numbers = #tpu.dot_dimension_numbers<[1], [0], [0], [1], [0, 0, 1, 1], [], []>} : vector<32x72xbf16>, vector<72x16xbf16>, vector<32x16xf32> -> vector<32x16xf32>
    %116 = arith.addf %97, %115 : vector<32x16xf32>
    %c0_i32_70 = arith.constant 0 : i32
    %117 = vector.broadcast %c0_i32_70 : i32 to vector<16x16xi32>
    %118 = arith.addi %96, %117 : vector<16x16xi32>
    %119 = arith.cmpi eq, %85, %118 : vector<16x16xi32>
    %c0_i32_71 = arith.constant 0 : i32
    %120 = vector.broadcast %c0_i32_71 : i32 to vector<16x16xi32>
    %121 = arith.cmpi sge, %118, %120 : vector<16x16xi32>
    %122 = arith.andi %119, %121 : vector<16x16xi1>
    %c16_i32_72 = arith.constant 16 : i32
    %123 = vector.broadcast %c16_i32_72 : i32 to vector<16x16xi32>
    %124 = arith.cmpi slt, %118, %123 : vector<16x16xi32>
    %125 = arith.andi %122, %124 : vector<16x16xi1>
    %cst_73 = arith.constant 1.000000e+00 : f32
    %cst_74 = arith.constant 0.000000e+00 : f32
    %126 = vector.broadcast %cst_73 : f32 to vector<16x16xf32>
    %127 = vector.broadcast %cst_74 : f32 to vector<16x16xf32>
    %128 = arith.select %125, %126, %127 : vector<16x16xi1>, vector<16x16xf32>
    %129 = arith.truncf %128 : vector<16x16xf32> to vector<16x16xbf16>
    %cst_75 = arith.constant dense<0.000000e+00> : vector<72x16xf32>
    %130 = tpu.matmul %83, %129, %cst_75 {dimension_numbers = #tpu.dot_dimension_numbers<[1], [0], [0], [1], [0, 0, 1, 1], [], []>} : vector<72x16xbf16>, vector<16x16xbf16>, vector<72x16xf32> -> vector<72x16xf32>
    %131 = arith.truncf %130 : vector<72x16xf32> to vector<72x16xbf16>
    %c1_76 = arith.constant 1 : index
    %c0_77 = arith.constant 0 : index
    %c0_78 = arith.constant 0 : index
    %132 = vector.load %arg2[%c1_76, %c0_77, %c0_78] : memref<3x32x72xbf16, #tpu.memory_space<vmem>>, vector<1x32x72xbf16>
    %133 = vector.shape_cast %132 : vector<1x32x72xbf16> to vector<32x72xbf16>
    %cst_79 = arith.constant dense<0.000000e+00> : vector<32x16xf32>
    %134 = tpu.matmul %133, %131, %cst_79 {dimension_numbers = #tpu.dot_dimension_numbers<[1], [0], [0], [1], [0, 0, 1, 1], [], []>} : vector<32x72xbf16>, vector<72x16xbf16>, vector<32x16xf32> -> vector<32x16xf32>
    %135 = arith.addf %116, %134 : vector<32x16xf32>
    %c1_i32_80 = arith.constant 1 : i32
    %136 = vector.broadcast %c1_i32_80 : i32 to vector<16x16xi32>
    %137 = arith.addi %96, %136 : vector<16x16xi32>
    %138 = arith.cmpi eq, %85, %137 : vector<16x16xi32>
    %c0_i32_81 = arith.constant 0 : i32
    %139 = vector.broadcast %c0_i32_81 : i32 to vector<16x16xi32>
    %140 = arith.cmpi sge, %137, %139 : vector<16x16xi32>
    %141 = arith.andi %138, %140 : vector<16x16xi1>
    %c16_i32_82 = arith.constant 16 : i32
    %142 = vector.broadcast %c16_i32_82 : i32 to vector<16x16xi32>
    %143 = arith.cmpi slt, %137, %142 : vector<16x16xi32>
    %144 = arith.andi %141, %143 : vector<16x16xi1>
    %cst_83 = arith.constant 1.000000e+00 : f32
    %cst_84 = arith.constant 0.000000e+00 : f32
    %145 = vector.broadcast %cst_83 : f32 to vector<16x16xf32>
    %146 = vector.broadcast %cst_84 : f32 to vector<16x16xf32>
    %147 = arith.select %144, %145, %146 : vector<16x16xi1>, vector<16x16xf32>
    %148 = arith.truncf %147 : vector<16x16xf32> to vector<16x16xbf16>
    %cst_85 = arith.constant dense<0.000000e+00> : vector<72x16xf32>
    %149 = tpu.matmul %83, %148, %cst_85 {dimension_numbers = #tpu.dot_dimension_numbers<[1], [0], [0], [1], [0, 0, 1, 1], [], []>} : vector<72x16xbf16>, vector<16x16xbf16>, vector<72x16xf32> -> vector<72x16xf32>
    %150 = arith.truncf %149 : vector<72x16xf32> to vector<72x16xbf16>
    %c2_86 = arith.constant 2 : index
    %c0_87 = arith.constant 0 : index
    %c0_88 = arith.constant 0 : index
    %151 = vector.load %arg2[%c2_86, %c0_87, %c0_88] : memref<3x32x72xbf16, #tpu.memory_space<vmem>>, vector<1x32x72xbf16>
    %152 = vector.shape_cast %151 : vector<1x32x72xbf16> to vector<32x72xbf16>
    %cst_89 = arith.constant dense<0.000000e+00> : vector<32x16xf32>
    %153 = tpu.matmul %152, %150, %cst_89 {dimension_numbers = #tpu.dot_dimension_numbers<[1], [0], [0], [1], [0, 0, 1, 1], [], []>} : vector<32x72xbf16>, vector<72x16xbf16>, vector<32x16xf32> -> vector<32x16xf32>
    %154 = arith.addf %135, %153 : vector<32x16xf32>
    %155 = vector.extract_strided_slice %154 {offsets = [0, 0], sizes = [8, 16], strides = [1, 1]} : vector<32x16xf32> to vector<8x16xf32>
    %156 = vector.extract_strided_slice %155 {offsets = [0, 0], sizes = [8, 8], strides = [1, 1]} : vector<8x16xf32> to vector<8x8xf32>
    %c0_90 = arith.constant 0 : index
    %c0_91 = arith.constant 0 : index
    %c0_92 = arith.constant 0 : index
    %c0_93 = arith.constant 0 : index
    %157 = vector.load %arg4[%c0_90, %c0_91, %c0_92, %c0_93] : memref<1x8x8x8xf32, #tpu.memory_space<vmem>>, vector<1x1x8x8xf32>
    %158 = vector.shape_cast %157 : vector<1x1x8x8xf32> to vector<8x8xf32>
    %159 = vector.shape_cast %156 : vector<8x8xf32> to vector<1x1x8x8xf32>
    tpu.vector_store %arg4[%c0_90, %c0_91, %c0_92, %c0_93], %159 {strides = array<i32>} : memref<1x8x8x8xf32, #tpu.memory_space<vmem>>, vector<1x1x8x8xf32>,
    %160 = vector.extract_strided_slice %155 {offsets = [0, 8], sizes = [8, 8], strides = [1, 1]} : vector<8x16xf32> to vector<8x8xf32>
    %c0_94 = arith.constant 0 : index
    %c1_95 = arith.constant 1 : index
    %c0_96 = arith.constant 0 : index
    %c0_97 = arith.constant 0 : index
    %161 = vector.load %arg4[%c0_94, %c1_95, %c0_96, %c0_97] : memref<1x8x8x8xf32, #tpu.memory_space<vmem>>, vector<1x1x8x8xf32>
    %162 = vector.shape_cast %161 : vector<1x1x8x8xf32> to vector<8x8xf32>
    %163 = vector.shape_cast %160 : vector<8x8xf32> to vector<1x1x8x8xf32>
    tpu.vector_store %arg4[%c0_94, %c1_95, %c0_96, %c0_97], %163 {strides = array<i32>} : memref<1x8x8x8xf32, #tpu.memory_space<vmem>>, vector<1x1x8x8xf32>,
    %164 = vector.extract_strided_slice %154 {offsets = [8, 0], sizes = [8, 16], strides = [1, 1]} : vector<32x16xf32> to vector<8x16xf32>
    %165 = vector.extract_strided_slice %164 {offsets = [0, 0], sizes = [8, 8], strides = [1, 1]} : vector<8x16xf32> to vector<8x8xf32>
    %c0_98 = arith.constant 0 : index
    %c2_99 = arith.constant 2 : index
    %c0_100 = arith.constant 0 : index
    %c0_101 = arith.constant 0 : index
    %166 = vector.load %arg4[%c0_98, %c2_99, %c0_100, %c0_101] : memref<1x8x8x8xf32, #tpu.memory_space<vmem>>, vector<1x1x8x8xf32>
    %167 = vector.shape_cast %166 : vector<1x1x8x8xf32> to vector<8x8xf32>
    %168 = vector.shape_cast %165 : vector<8x8xf32> to vector<1x1x8x8xf32>
    tpu.vector_store %arg4[%c0_98, %c2_99, %c0_100, %c0_101], %168 {strides = array<i32>} : memref<1x8x8x8xf32, #tpu.memory_space<vmem>>, vector<1x1x8x8xf32>,
    %169 = vector.extract_strided_slice %164 {offsets = [0, 8], sizes = [8, 8], strides = [1, 1]} : vector<8x16xf32> to vector<8x8xf32>
    %c0_102 = arith.constant 0 : index
    %c3_103 = arith.constant 3 : index
    %c0_104 = arith.constant 0 : index
    %c0_105 = arith.constant 0 : index
    %170 = vector.load %arg4[%c0_102, %c3_103, %c0_104, %c0_105] : memref<1x8x8x8xf32, #tpu.memory_space<vmem>>, vector<1x1x8x8xf32>
    %171 = vector.shape_cast %170 : vector<1x1x8x8xf32> to vector<8x8xf32>
    %172 = vector.shape_cast %169 : vector<8x8xf32> to vector<1x1x8x8xf32>
    tpu.vector_store %arg4[%c0_102, %c3_103, %c0_104, %c0_105], %172 {strides = array<i32>} : memref<1x8x8x8xf32, #tpu.memory_space<vmem>>, vector<1x1x8x8xf32>,
    %173 = vector.extract_strided_slice %154 {offsets = [16, 0], sizes = [8, 16], strides = [1, 1]} : vector<32x16xf32> to vector<8x16xf32>
    %174 = vector.extract_strided_slice %173 {offsets = [0, 0], sizes = [8, 8], strides = [1, 1]} : vector<8x16xf32> to vector<8x8xf32>
    %c0_106 = arith.constant 0 : index
    %c4 = arith.constant 4 : index
    %c0_107 = arith.constant 0 : index
    %c0_108 = arith.constant 0 : index
    %175 = vector.load %arg4[%c0_106, %c4, %c0_107, %c0_108] : memref<1x8x8x8xf32, #tpu.memory_space<vmem>>, vector<1x1x8x8xf32>
    %176 = vector.shape_cast %175 : vector<1x1x8x8xf32> to vector<8x8xf32>
    %177 = vector.shape_cast %174 : vector<8x8xf32> to vector<1x1x8x8xf32>
    tpu.vector_store %arg4[%c0_106, %c4, %c0_107, %c0_108], %177 {strides = array<i32>} : memref<1x8x8x8xf32, #tpu.memory_space<vmem>>, vector<1x1x8x8xf32>,
    %178 = vector.extract_strided_slice %173 {offsets = [0, 8], sizes = [8, 8], strides = [1, 1]} : vector<8x16xf32> to vector<8x8xf32>
    %c0_109 = arith.constant 0 : index
    %c5 = arith.constant 5 : index
    %c0_110 = arith.constant 0 : index
    %c0_111 = arith.constant 0 : index
    %179 = vector.load %arg4[%c0_109, %c5, %c0_110, %c0_111] : memref<1x8x8x8xf32, #tpu.memory_space<vmem>>, vector<1x1x8x8xf32>
    %180 = vector.shape_cast %179 : vector<1x1x8x8xf32> to vector<8x8xf32>
    %181 = vector.shape_cast %178 : vector<8x8xf32> to vector<1x1x8x8xf32>
    tpu.vector_store %arg4[%c0_109, %c5, %c0_110, %c0_111], %181 {strides = array<i32>} : memref<1x8x8x8xf32, #tpu.memory_space<vmem>>, vector<1x1x8x8xf32>,
    %182 = vector.extract_strided_slice %154 {offsets = [24, 0], sizes = [8, 16], strides = [1, 1]} : vector<32x16xf32> to vector<8x16xf32>
    %183 = vector.extract_strided_slice %182 {offsets = [0, 0], sizes = [8, 8], strides = [1, 1]} : vector<8x16xf32> to vector<8x8xf32>
    %c0_112 = arith.constant 0 : index
    %c6 = arith.constant 6 : index
    %c0_113 = arith.constant 0 : index
    %c0_114 = arith.constant 0 : index
    %184 = vector.load %arg4[%c0_112, %c6, %c0_113, %c0_114] : memref<1x8x8x8xf32, #tpu.memory_space<vmem>>, vector<1x1x8x8xf32>
    %185 = vector.shape_cast %184 : vector<1x1x8x8xf32> to vector<8x8xf32>
    %186 = vector.shape_cast %183 : vector<8x8xf32> to vector<1x1x8x8xf32>
    tpu.vector_store %arg4[%c0_112, %c6, %c0_113, %c0_114], %186 {strides = array<i32>} : memref<1x8x8x8xf32, #tpu.memory_space<vmem>>, vector<1x1x8x8xf32>,
    %187 = vector.extract_strided_slice %182 {offsets = [0, 8], sizes = [8, 8], strides = [1, 1]} : vector<8x16xf32> to vector<8x8xf32>
    %c0_115 = arith.constant 0 : index
    %c7 = arith.constant 7 : index
    %c0_116 = arith.constant 0 : index
    %c0_117 = arith.constant 0 : index
    %188 = vector.load %arg4[%c0_115, %c7, %c0_116, %c0_117] : memref<1x8x8x8xf32, #tpu.memory_space<vmem>>, vector<1x1x8x8xf32>
    %189 = vector.shape_cast %188 : vector<1x1x8x8xf32> to vector<8x8xf32>
    %190 = vector.shape_cast %187 : vector<8x8xf32> to vector<1x1x8x8xf32>
    tpu.vector_store %arg4[%c0_115, %c7, %c0_116, %c0_117], %190 {strides = array<i32>} : memref<1x8x8x8xf32, #tpu.memory_space<vmem>>, vector<1x1x8x8xf32>,
    return
  }
  func.func @transform_0(%arg0: i32, %arg1: i32) -> (i32, i32, i32) {
    %c0_i32 = arith.constant 0 : i32
    %c0_i32_0 = arith.constant 0 : i32
    %c0_i32_1 = arith.constant 0 : i32
    %c0_i32_2 = arith.constant 0 : i32
    return %c0_i32, %c0_i32_0, %c0_i32_1 : i32, i32, i32
  }
  func.func @transform_1(%arg0: i32, %arg1: i32) -> (i32, i32, i32, i32) {
    %c0_i32 = arith.constant 0 : i32
    %c0_i32_0 = arith.constant 0 : i32
    %c0_i32_1 = arith.constant 0 : i32
    %c0_i32_2 = arith.constant 0 : i32
    return %arg0, %c0_i32, %c0_i32_0, %c0_i32_1 : i32, i32, i32, i32
  }
  func.func @transform_2(%arg0: i32, %arg1: i32) -> (i32, i32, i32, i32) {
    %c0_i32 = arith.constant 0 : i32
    %c0_i32_0 = arith.constant 0 : i32
    %c0_i32_1 = arith.constant 0 : i32
    return %arg0, %c0_i32, %arg1, %c0_i32_0 : i32, i32, i32, i32
  }
}

</mosaic_0001>

<llo_original>
// kernel: downsample_forward.1
$region0: #{downsample_forward.1}
  #allocation0 [shape = 'u32[]', space=smem, size = 0x4, offset = 0x4, fixed_abs, tag = 'smem constant byte address 0x4 - core index']
  #allocation1 [shape = 'u32[72,128]{1,0:T(1,128)}', space=vmem, size = 0x9000, scoped, tag = 'internal scratch']
  #allocation2 [shape = 'bf16[72,16]{1,0:T(8,128)(2,1)}', space=vmem, size = 0x4800, scoped, tag = 'scratch operand']
  %s0 = inlined_call_operand.vmem [shape: bf16[3,32,72], index: 0, kind: input, shape index: {}]
  %s1 = inlined_call_operand.vmem [shape: f32[2,4,16,16], index: 1, kind: input, shape index: {}]
  %s2 = inlined_call_operand.hbm [shape: f32[2,8,8,8], index: 2, kind: output, shape index: {}]
  %s3 = sld [smem:[#allocation0]]
  $region41: #{downsample_forward.1} parent=0
    _
  %s5 = ssub.s32 1, %s3
  %s6 = scalar_select 0, %s5, %s3
  $region1: #{downsample_forward.1} parent=0
    #allocation3 [shape = 'u8[65536]{0}', space=vmem, size = 0x10000, scoped, tag = 'output window, operand 0']
    #allocation4 [shape = 's32[2]{0}', space=sflag, size = 0x8, scoped, tag = 'scoped memory for downsample_forward.1']
    %7 = vsyncpa [#allocation4], 0
    %s8 = scalar_lea.sflag [#allocation4], 1
    %9 = vsyncpa %s8, 0
    loop: start=0, step=1, limit=4
    $region2: #{downsample_forward.1} parent=1 // loop_pre_header
      _
    $region3: #{downsample_forward.1} parent=1 // loop_header
      %s11 = sphi 0, %s15
      %p12 = scmp.ge.s32.totalorder %s11, 4
      %s18 = sphi 0, %s30
      %s19 = sphi 0, %s26
      %s20 = sphi 0, %s18
      %s21 = sphi 0, %s19
      %s22 = sphi 0, %s20
      %s23 = sphi 0, %s21
      %s31 = sphi 0, %s31
      %s33 = sphi 0, %s31
      %s34 = sphi 0, %s33
      %s48 = sphi 0, %s34
      %s54 = sphi 0, %s56
      %s57 = sphi 0, %s54
      %s58 = sphi 0, %s57
      %s74 = sphi 0, %s58
      %s82 = sphi 0, %s84
      %s85 = sphi 0, %s82
      %s86 = sphi 0, %s85
      %s102 = sphi 0, %s86
    $region4: #{downsample_forward.1} parent=1 // loop_header_branch
      %14 = sbr.rel (%p12) target = $region8
    $region5: #{downsample_forward.1} parent=1 // loop_body
      %s16 = ssub.s32 %s11, 1
      %s17 = ssub.s32 %s11, 2
      %s24 = sadd.s32 1, %s19
      %p25 = scmp.ge.s32.totalorder %s24, 1
      %s26 = scalar_select %p25, 0, %s24
      %s27 = sadd.s32 1, %s18
      %s28 = scalar_select %p25, %s27, %s18
      %p29 = scmp.ge.s32.totalorder %s28, 2
      %s30 = scalar_select %p29, 0, %s28
      %s32 = sadd.s32 %s31, 1
      %p35 = scmp.eq.s32.totalorder %s11, 1
      %p36 = scmp.ne.s32.totalorder %s31, %s33
      %p37 = scmp.eq.s32.totalorder %s11, 0
      %p38 = por %p36, %p37
      %p39 = scmp.ne.s32.totalorder %s31, %s33
      %p40 = scmp.eq.s32.totalorder %s16, 1
      %p41 = por %p39, %p40
      %p42 = scmp.ne.s32.totalorder %s33, %s34
      %p43 = scmp.eq.s32.totalorder %s16, 0
      %p44 = por %p42, %p43
      %p45 = scmp.ne.s32.totalorder %s33, %s34
      %p46 = scmp.eq.s32.totalorder %s17, 1
      %p47 = por %p45, %p46
      %p49 = scmp.ne.s32.totalorder %s34, %s48
      %p50 = scmp.eq.s32.totalorder %s17, 0
      %p51 = por %p49, %p50
      %s52 = ssub.s32 %s18, %s30
      %p53 = scmp.eq.s32.totalorder %s52, 0
      %s55 = sadd.s32 %s54, 1
      %s56 = scalar_select %p53, %s54, %s55
      %p59 = pneg %p53
      %p60 = scmp.eq.s32.totalorder %s11, 1
      %p61 = por %p59, %p60
      %p62 = scmp.ne.s32.totalorder %s54, %s57
      %p63 = scmp.eq.s32.totalorder %s11, 0
      %p64 = por %p62, %p63
      %p65 = scmp.ne.s32.totalorder %s54, %s57
      %p66 = scmp.eq.s32.totalorder %s16, 1
      %p67 = por %p65, %p66
      %p68 = scmp.ne.s32.totalorder %s57, %s58
      %p69 = scmp.eq.s32.totalorder %s16, 0
      %p70 = por %p68, %p69
      %p71 = scmp.ne.s32.totalorder %s57, %s58
      %p72 = scmp.eq.s32.totalorder %s17, 1
      %p73 = por %p71, %p72
      %p75 = scmp.ne.s32.totalorder %s58, %s74
      %p76 = scmp.eq.s32.totalorder %s17, 0
      %p77 = por %p75, %p76
      %s78 = ssub.s32 %s18, %s30
      %s79 = ssub.s32 %s19, %s26
      %s80 = sor.u32 %s78, %s79
      %p81 = scmp.eq.s32.totalorder %s80, 0
      %s83 = sadd.s32 %s82, 1
      %s84 = scalar_select %p81, %s82, %s83
      %p87 = pneg %p81
      %p88 = scmp.eq.s32.totalorder %s11, 1
      %p89 = por %p87, %p88
      %p90 = scmp.ne.s32.totalorder %s82, %s85
      %p91 = scmp.eq.s32.totalorder %s11, 0
      %p92 = por %p90, %p91
      %p93 = scmp.ne.s32.totalorder %s82, %s85
      %p94 = scmp.eq.s32.totalorder %s16, 1
      %p95 = por %p93, %p94
      %p96 = scmp.ne.s32.totalorder %s85, %s86
      %p97 = scmp.eq.s32.totalorder %s16, 0
      %p98 = por %p96, %p97
      %p99 = scmp.ne.s32.totalorder %s85, %s86
      %p100 = scmp.eq.s32.totalorder %s17, 1
      %p101 = por %p99, %p100
      %p103 = scmp.ne.s32.totalorder %s86, %s102
      %p104 = scmp.eq.s32.totalorder %s17, 0
      %p105 = por %p103, %p104
      %p106 = scmp.le.s32.totalorder 1, %s11
      %p107 = scmp.lt.s32.totalorder %s11, 3
      %p108 = pnand %p106, %p107
      %p109 = pneg %p108
      // Predicated region
      $region9: #{downsample_forward.1} parent=5 // pred_check
        _
      $region10: #{downsample_forward.1} parent=5 // pred_check_branch
        %111 = sbr.rel (%p108) target = $region12
      $region11: #{downsample_forward.1} parent=5 // pred_region
        %s112 = ssub.s32 %s11, 1
        // Predicated region
        $region13: #{downsample_forward.1} parent=11 // pred_check
          %p113 = pneg %p44
        $region14: #{downsample_forward.1} parent=11 // pred_check_branch
          %115 = sbr.rel (%p113) target = $region16
        $region15: #{downsample_forward.1} parent=11 // pred_region
          _
        $region16: #{downsample_forward.1} parent=11 // pred_fallthru
          _
      $region12: #{downsample_forward.1} parent=5 // pred_fallthru
        _
      %p116 = scmp.lt.s32.totalorder %s11, 2
      // Predicated region
      $region17: #{downsample_forward.1} parent=5 // pred_check
        %p117 = pneg %p116
      $region18: #{downsample_forward.1} parent=5 // pred_check_branch
        %119 = sbr.rel (%p117) target = $region20
      $region19: #{downsample_forward.1} parent=5 // pred_region
        // Predicated region
        $region21: #{downsample_forward.1} parent=19 // pred_check
          %p120 = pneg %p64
        $region22: #{downsample_forward.1} parent=19 // pred_check_branch
          %122 = sbr.rel (%p120) target = $region24
        $region23: #{downsample_forward.1} parent=19 // pred_region
          %p123 = scmp.lt.s32.totalorder %s18, 1
          %s124 = scalar_select %p123, %s18, 1
          %s125 = smul.addr %s124, 8
          %s126 = smul.addr %s125, 8
          %s127 = scalar_lea.vmem %s1, %s126
        $region24: #{downsample_forward.1} parent=19 // pred_fallthru
          _
      $region20: #{downsample_forward.1} parent=5 // pred_fallthru
        _
      %p128 = scmp.le.s32.totalorder 1, %s11
      %p129 = scmp.lt.s32.totalorder %s11, 3
      %p130 = pnand %p128, %p129
      %p131 = pneg %p130
      // Predicated region
      $region25: #{downsample_forward.1} parent=5 // pred_check
        _
      $region26: #{downsample_forward.1} parent=5 // pred_check_branch
        %133 = sbr.rel (%p130) target = $region28
      $region27: #{downsample_forward.1} parent=5 // pred_region
        %s134 = ssub.s32 %s11, 1
        %p135 = pneg %p44
        %p136 = pneg %p41
        %p137 = scmp.lt.s32.totalorder %s20, 1
        %s138 = scalar_select %p137, %s20, 1
        %s139 = smul.addr %s138, 8
        %s140 = smul.addr %s139, 8
        %s141 = scalar_lea.vmem %s1, %s140
        %p142 = pneg %p70
        %p143 = pneg %p67
        %p144 = pneg %p98
        %p145 = pneg %p95
        %s146 = sand.u32 %s85, 1
        %s147 = scalar_lea.sflag [#allocation4], %s146
        %s148 = sand.u32 %s85, 1
        %s149 = smul.addr %s148, 64
        %s150 = scalar_lea.vmem [#allocation3], %s149
        %p151 = scmp.lt.s32.totalorder %s20, 1
        %s152 = scalar_select %p151, %s20, 1
        %s153 = smul.addr %s152, 8
        %s154 = smul.addr %s153, 8
        %s155 = scalar_lea.vmem %s1, %s154
        %s157 = smul.u32 %s21, 16
        %s158 = ssub.s32 %s157, 1
        %p159 = scmp.gt.s32.totalorder %s158, 0
        %s160 = scalar_select %p159, %s158, 0
        %s161 = sadd.s32 %s157, 16
        %p162 = scmp.lt.s32.totalorder %s161, 15
        %s163 = scalar_select %p162, %s161, 15
        %s164 = scalar_lea.vmem %s155, %s160
        %v165 = vld [vmem:[%s164] sm:$0x1]
        %v166 = vpack.c.bf16 %v165, %v165
        %p167 = scmp.gt.s32.totalorder %s21, 0
        %s168 = scalar_select %p167, 1, 0
        %v169 = vstv %s168
        %vm170 = vcmp.eq.s32.totalorder %v169, 1
        %v171 = vsel %vm170, %v166, 0
        %vm172 = vcmask 122880
        %vm173 = vsmask.f32 256
        %vm174 = vmand %vm172, %vm173
        %v175 = vld [vmem:[#allocation2] sm:$0x1]
        %v176 = vsel %vm174, %v171, %v175
        %177 = vst [vmem:[#allocation2] sm:$0x1] %v176
        %s178 = scalar_lea.vmem %s155, %s157
        %v179 = vld [vmem:[%s178] sm:$0xff]
        %v180 = vld [vmem:[%s178 + $0x8] sm:$0xff]
        %v181 = vpack.c.bf16 %v179, %v179
        %v182 = vpack.c.bf16 %v180, %v180
        %vm183 = vsmask.f32 4368
        %vm184 = vmor %vm173, %vm183
        %v186 = vshrl.u32 %v181, 16
        %v188 = vrot.slane %v186, 7
        %v189 = vshll.u32 %v181, 16
        %v191 = vor.u32 %v188, %v189
        %v192 = vrot.slane %v188, 4
        %v194 = vshrl.u32 %v182, 16
        %v196 = vrot.slane %v194, 7
        %v197 = vshll.u32 %v182, 16
        %v199 = vor.u32 %v196, %v197
        %v200 = vsel %vm184, %v192, %v199
        %v201 = vrot.slane %v196, 4
        %vm205 = vcmask 125952
        %vm206 = vsmask.f32 7938
        %vm207 = vmand %vm205, %vm206
        %v208 = vld [vmem:[#allocation2] sm:$0xf]
        %v209 = vsel %vm207, %v191, %v208
        %210 = vst [vmem:[#allocation2] sm:$0xf] %v209
        %vm211 = vcmask 125952
        %212 = vst.msk [vmem:[#allocation2 + $0x4] sm:$0xf] %vm211, %v200
        %v213 = vld [vmem:[#allocation2 + $0x8] sm:$0x1]
        %v214 = vsel %vm174, %v201, %v213
        %215 = vst [vmem:[#allocation2 + $0x8] sm:$0x1] %v214
        %s216 = scalar_lea.vmem %s155, %s163
        %v217 = vld [vmem:[%s216] sm:$0x1]
        %v218 = vpack.c.bf16 %v217, %v217
        %p219 = scmp.lt.s32.totalorder %s21, 0
        %s220 = scalar_select %p219, 1, 0
        %v221 = vstv %s220
        %vm222 = vcmp.eq.s32.totalorder %v221, 1
        %v223 = vsel %vm222, %v218, 0
        %v225 = vshll.u32 %v223, 16
        %vm228 = vmand %vm172, %vm206
        %v229 = vld [vmem:[#allocation2 + $0x8] sm:$0x1]
        %v230 = vsel %vm228, %v225, %v229
        %231 = vst [vmem:[#allocation2 + $0x8] sm:$0x1] %v230
        %s232 = sadd.s32 %s160, 16
        %s233 = scalar_lea.vmem %s155, %s232
        %v234 = vld [vmem:[%s233] sm:$0x1]
        %v235 = vpack.c.bf16 %v234, %v234
        %v236 = vsel %vm170, %v235, 0
        %v238 = vrot.slane %v236, 7
        %vm240 = vcmask 123905
        %vm241 = vsmask.f32 1280
        %vm242 = vmand %vm240, %vm241
        %v243 = vld [vmem:[#allocation2 + $0x8] sm:$0x2]
        %v244 = vsel %vm242, %v238, %v243
        %245 = vst [vmem:[#allocation2 + $0x8] sm:$0x2] %v244
        %s246 = scalar_lea.vmem %s155, %s161
        %v247 = vld [vmem:[%s246] sm:$0xff]
        %v248 = vld [vmem:[%s246 + $0x8] sm:$0xff]
        %v249 = vpack.c.bf16 %v247, %v247
        %v250 = vpack.c.bf16 %v248, %v248
        %vm251 = vsmask.f32 5392
        %vm252 = vmor %vm241, %vm251
        %v254 = vshrl.u32 %v249, 16
        %v256 = vrot.slane %v254, 6
        %v257 = vshll.u32 %v249, 16
        %v259 = vrot.slane %v257, 7
        %v260 = vor.u32 %v256, %v259
        %v261 = vrot.slane %v260, 4
        %v263 = vshrl.u32 %v250, 16
        %v265 = vrot.slane %v263, 6
        %v266 = vshll.u32 %v250, 16
        %v268 = vrot.slane %v266, 7
        %v269 = vor.u32 %v265, %v268
        %v270 = vsel %vm252, %v261, %v269
        %v271 = vrot.slane %v269, 4
        %vm275 = vcmask 125953
        %vm276 = vsmask.f32 7942
        %vm277 = vmand %vm275, %vm276
        %v278 = vld [vmem:[#allocation2 + $0x8] sm:$0xe]
        %v279 = vsel %vm277, %v260, %v278
        %280 = vst [vmem:[#allocation2 + $0x8] sm:$0xe] %v279
        %281 = vst.msk [vmem:[#allocation2 + $0xc] sm:$0xf] %vm211, %v270
        %vm282 = vcmask 123904
        %vm283 = vmand %vm282, %vm241
        %v284 = vld [vmem:[#allocation2 + $0x10] sm:$0x3]
        %v285 = vsel %vm283, %v271, %v284
        %286 = vst [vmem:[#allocation2 + $0x10] sm:$0x3] %v285
        %s287 = sadd.s32 %s163, 16
        %s288 = scalar_lea.vmem %s155, %s287
        %v289 = vld [vmem:[%s288] sm:$0x1]
        %v290 = vpack.c.bf16 %v289, %v289
        %v291 = vsel %vm222, %v290, 0
        %v293 = vshll.u32 %v291, 16
        %v295 = vrot.slane %v293, 7
        %vm297 = vmand %vm240, %vm276
        %v298 = vld [vmem:[#allocation2 + $0x10] sm:$0x2]
        %v299 = vsel %vm297, %v295, %v298
        %300 = vst [vmem:[#allocation2 + $0x10] sm:$0x2] %v299
        %s301 = sadd.s32 %s160, 32
        %s302 = scalar_lea.vmem %s155, %s301
        %v303 = vld [vmem:[%s302] sm:$0x1]
        %v304 = vpack.c.bf16 %v303, %v303
        %v305 = vsel %vm170, %v304, 0
        %v307 = vrot.slane %v305, 6
        %vm309 = vcmask 124930
        %vm310 = vsmask.f32 2304
        %vm311 = vmand %vm309, %vm310
        %v312 = vld [vmem:[#allocation2 + $0x10] sm:$0x4]
        %v313 = vsel %vm311, %v307, %v312
        %314 = vst [vmem:[#allocation2 + $0x10] sm:$0x4] %v313
        %s315 = sadd.s32 %s157, 32
        %s316 = scalar_lea.vmem %s155, %s315
        %v317 = vld [vmem:[%s316] sm:$0xff]
        %v318 = vld [vmem:[%s316 + $0x8] sm:$0xff]
        %v319 = vpack.c.bf16 %v317, %v317
        %v320 = vpack.c.bf16 %v318, %v318
        %vm321 = vsmask.f32 6416
        %vm322 = vmor %vm310, %vm321
        %v324 = vshrl.u32 %v319, 16
        %v326 = vrot.slane %v324, 5
        %v327 = vshll.u32 %v319, 16
        %v329 = vrot.slane %v327, 6
        %v330 = vor.u32 %v326, %v329
        %v331 = vrot.slane %v330, 4
        %v333 = vshrl.u32 %v320, 16
        %v335 = vrot.slane %v333, 5
        %v336 = vshll.u32 %v320, 16
        %v338 = vrot.slane %v336, 6
        %v339 = vor.u32 %v335, %v338
        %v340 = vsel %vm322, %v331, %v339
        %v341 = vrot.slane %v339, 4
        %vm345 = vcmask 125954
        %vm346 = vsmask.f32 7946
        %vm347 = vmand %vm345, %vm346
        %v348 = vld [vmem:[#allocation2 + $0x10] sm:$0xc]
        %v349 = vsel %vm347, %v330, %v348
        %350 = vst [vmem:[#allocation2 + $0x10] sm:$0xc] %v349
        %351 = vst.msk [vmem:[#allocation2 + $0x14] sm:$0xf] %vm211, %v340
        %vm352 = vcmask 124928
        %vm353 = vmand %vm352, %vm310
        %v354 = vld [vmem:[#allocation2 + $0x18] sm:$0x7]
        %v355 = vsel %vm353, %v341, %v354
        %356 = vst [vmem:[#allocation2 + $0x18] sm:$0x7] %v355
        %s357 = sadd.s32 %s163, 32
        %s358 = scalar_lea.vmem %s155, %s357
        %v359 = vld [vmem:[%s358] sm:$0x1]
        %v360 = vpack.c.bf16 %v359, %v359
        %v361 = vsel %vm222, %v360, 0
        %v363 = vshll.u32 %v361, 16
        %v365 = vrot.slane %v363, 6
        %vm367 = vmand %vm309, %vm346
        %v368 = vld [vmem:[#allocation2 + $0x18] sm:$0x4]
        %v369 = vsel %vm367, %v365, %v368
        %370 = vst [vmem:[#allocation2 + $0x18] sm:$0x4] %v369
        %s371 = sadd.s32 %s160, 48
        %s372 = scalar_lea.vmem %s155, %s371
        %v373 = vld [vmem:[%s372] sm:$0x1]
        %v374 = vpack.c.bf16 %v373, %v373
        %v375 = vsel %vm170, %v374, 0
        %v377 = vrot.slane %v375, 5
        %vm379 = vcmask 125955
        %vm380 = vsmask.f32 3328
        %vm381 = vmand %vm379, %vm380
        %v382 = vld [vmem:[#allocation2 + $0x18] sm:$0x8]
        %v383 = vsel %vm381, %v377, %v382
        %384 = vst [vmem:[#allocation2 + $0x18] sm:$0x8] %v383
        %s385 = sadd.s32 %s157, 48
        %s386 = scalar_lea.vmem %s155, %s385
        %v387 = vld [vmem:[%s386] sm:$0xff]
        %v388 = vld [vmem:[%s386 + $0x8] sm:$0xff]
        %v389 = vpack.c.bf16 %v387, %v387
        %v390 = vpack.c.bf16 %v388, %v388
        %vm391 = vsmask.f32 7440
        %vm392 = vmor %vm380, %vm391
        %v394 = vshll.u32 %v389, 16
        %v396 = vrot.slane %v394, 5
        %v397 = vshrl.u32 %v389, 16
        %v399 = vrot.slane %v397, 4
        %v400 = vor.u32 %v399, %v396
        %v401 = vrot.slane %v400, 4
        %v403 = vshll.u32 %v390, 16
        %v405 = vrot.slane %v403, 5
        %v406 = vsel %vm392, %v401, %v405
        %v407 = vshrl.u32 %v390, 16
        %v409 = vrot.slane %v407, 4
        %v410 = vor.u32 %v409, %v405
        %v411 = vrot.slane %v410, 4
        %vm415 = vsmask.f32 7950
        %vm416 = vmand %vm379, %vm415
        %v417 = vld [vmem:[#allocation2 + $0x18] sm:$0x8]
        %v418 = vsel %vm416, %v396, %v417
        %419 = vst [vmem:[#allocation2 + $0x18] sm:$0x8] %v418
        %420 = vst.msk [vmem:[#allocation2 + $0x1c] sm:$0xf] %vm211, %v406
        %vm421 = vmand %vm205, %vm380
        %v422 = vld [vmem:[#allocation2 + $0x20] sm:$0xf]
        %v423 = vsel %vm421, %v411, %v422
        %424 = vst [vmem:[#allocation2 + $0x20] sm:$0xf] %v423
        %s425 = sadd.s32 %s163, 48
        %s426 = scalar_lea.vmem %s155, %s425
        %v427 = vld [vmem:[%s426] sm:$0x1]
        %v428 = vpack.c.bf16 %v427, %v427
        %v429 = vsel %vm222, %v428, 0
        %v431 = vshll.u32 %v429, 16
        %v433 = vrot.slane %v431, 5
        %v435 = vld [vmem:[#allocation2 + $0x20] sm:$0x8]
        %v436 = vsel %vm416, %v433, %v435
        %437 = vst [vmem:[#allocation2 + $0x20] sm:$0x8] %v436
        %v438 = vld [vmem:[#allocation2] sm:$0xf]
        %v439 = vld [vmem:[#allocation2 + $0x4] sm:$0xf]
        %v440 = vld [vmem:[#allocation2 + $0x8] sm:$0xf]
        %v441 = vld [vmem:[#allocation2 + $0xc] sm:$0xf]
        %v442 = vld [vmem:[#allocation2 + $0x10] sm:$0xf]
        %v443 = vld [vmem:[#allocation2 + $0x14] sm:$0xf]
        %v444 = vld [vmem:[#allocation2 + $0x18] sm:$0xf]
        %v445 = vld [vmem:[#allocation2 + $0x1c] sm:$0xf]
        %v446 = vld [vmem:[#allocation2 + $0x20] sm:$0xf]
        %v447 = vlaneseq
        %v448 = vand.u32 %v447, 127
        %v449 = vlaneseq
        %v450 = vshrl.u32 %v449, 7
        %v451 = vadd.s32 %v450, 8
        %vm452 = vcmp.lt.s32.totalorder %v448, 8
        %v453 = vmul.u32 %v448, 2
        %v454 = vsub.s32 %v448, 8
        %v455 = vmul.u32 %v454, 2
        %v456 = vadd.s32 %v455, 1
        %v457 = vsel %vm452, %v453, %v456
        %v458 = vadd.s32 %v457, 4294967295
        %vm459 = vcmp.eq.s32.totalorder %v450, %v458
        %vm460 = vcmp.eq.s32.totalorder %v451, %v458
        %vm461 = vcmp.ge.s32.totalorder %v458, 0
        %vm462 = vmand %vm459, %vm461
        %vm463 = vmand %vm460, %vm461
        %vm464 = vcmp.lt.s32.totalorder %v458, 16
        %vm465 = vmand %vm462, %vm464
        %vm466 = vmand %vm463, %vm464
        %v467 = vsel %vm465, 1.0, 0.0
        %v468 = vsel %vm466, 1.0, 0.0
        %v469 = vpack.c.bf16 %v468, %v467
        %v479 = vunpack.c.l.b16 %v438
        %v480 = vunpack.c.l.b16 %v439
        %v481 = vunpack.c.l.b16 %v440
        %v482 = vunpack.c.l.b16 %v441
        %v483 = vunpack.c.l.b16 %v442
        %v484 = vunpack.c.l.b16 %v443
        %v485 = vunpack.c.l.b16 %v444
        %v486 = vunpack.c.l.b16 %v445
        %v487 = vunpack.c.l.b16 %v446
        %v488 = vpack.c.b16 %v480, %v479
        %v489 = vpack.c.b16 %v482, %v481
        %v490 = vpack.c.b16 %v484, %v483
        %v491 = vpack.c.b16 %v486, %v485
        %v492 = vpack.c.b16 %v487, %v487
        %vm493 = vcmask 130048
        %v495 = vsel %vm493, %v488, 0
        %v498 = vsel %vm493, %v489, 0
        %v501 = vsel %vm493, %v490, 0
        %v504 = vsel %vm493, %v491, 0
        %v507 = vsel %vm493, %v492, 0
        %509 = vmatpush.bf16.msra.mxu0 0
        %510 = vmatpush.bf16.msra.mxu0 0
        %511 = vmatpush.bf16.msra.mxu0 0
        %512 = vmatpush.bf16.msra.mxu0 0
        %513 = vmatpush.bf16.msra.mxu0 0
        %514 = vmatpush.bf16.msra.mxu0 0
        %515 = vmatpush.bf16.msra.mxu0 0
        %516 = vmatpush.bf16.msra.mxu0 %v469
        %517 = vmatmul.bf16.gmra.mxu0 %v495
        %v518 = vpop.f32.mrf.mxu0
        %v519 = vadd.f32 0.0, %v518
        %v520 = vpop.f32.mrf.mxu0
        %v521 = vadd.f32 0.0, %v520
        %522 = vmatmul.bf16.gmra.mxu0 %v498
        %v523 = vpop.f32.mrf.mxu0
        %v524 = vadd.f32 0.0, %v523
        %v525 = vpop.f32.mrf.mxu0
        %v526 = vadd.f32 0.0, %v525
        %527 = vmatmul.bf16.gmra.mxu0 %v501
        %v528 = vpop.f32.mrf.mxu0
        %v529 = vadd.f32 0.0, %v528
        %v530 = vpop.f32.mrf.mxu0
        %v531 = vadd.f32 0.0, %v530
        %532 = vmatmul.bf16.gmra.mxu0 %v504
        %v533 = vpop.f32.mrf.mxu0
        %v534 = vadd.f32 0.0, %v533
        %v535 = vpop.f32.mrf.mxu0
        %v536 = vadd.f32 0.0, %v535
        %537 = vmatmul.bf16.gmra.mxu0 %v507
        %v538 = vpop.f32.mrf.mxu0
        %v539 = vadd.f32 0.0, %v538
        %v540 = vpop.f32.mrf.mxu0
        %541 = vdwg.mxu0
        %v542 = vpack.c.bf16 %v521, %v519
        %v543 = vpack.c.bf16 %v526, %v524
        %v544 = vpack.c.bf16 %v531, %v529
        %v545 = vpack.c.bf16 %v536, %v534
        %v546 = vpack.c.bf16 %v539, %v539
        %v547 = vld [vmem:[%s0] sm:$0xf]
        %v548 = vld [vmem:[%s0 + $0x4] sm:$0xf]
        %v549 = vld [vmem:[%s0 + $0x8] sm:$0xf]
        %v550 = vld [vmem:[%s0 + $0xc] sm:$0xf]
        %vm551 = vcmp.eq.s32.totalorder %v450, %v457
        %vm552 = vcmp.eq.s32.totalorder %v451, %v457
        %vm553 = vcmp.ge.s32.totalorder %v457, 0
        %vm554 = vmand %vm551, %vm553
        %vm555 = vmand %vm552, %vm553
        %vm556 = vcmp.lt.s32.totalorder %v457, 16
        %vm557 = vmand %vm554, %vm556
        %vm558 = vmand %vm555, %vm556
        %v559 = vsel %vm557, 1.0, 0.0
        %v560 = vsel %vm558, 1.0, 0.0
        %v561 = vpack.c.bf16 %v560, %v559
        %562 = vmatpush.bf16.msra.mxu0 0
        %563 = vmatpush.bf16.msra.mxu0 0
        %564 = vmatpush.bf16.msra.mxu0 0
        %565 = vmatpush.bf16.msra.mxu0 0
        %566 = vmatpush.bf16.msra.mxu0 0
        %567 = vmatpush.bf16.msra.mxu0 0
        %568 = vmatpush.bf16.msra.mxu0 0
        %569 = vmatpush.bf16.msra.mxu0 %v561
        %570 = vmatmul.bf16.gmra.mxu0 %v495
        %v571 = vpop.f32.mrf.mxu0
        %v572 = vadd.f32 0.0, %v571
        %v573 = vpop.f32.mrf.mxu0
        %v574 = vadd.f32 0.0, %v573
        %575 = vmatmul.bf16.gmra.mxu0 %v498
        %v576 = vpop.f32.mrf.mxu0
        %v577 = vadd.f32 0.0, %v576
        %v578 = vpop.f32.mrf.mxu0
        %v579 = vadd.f32 0.0, %v578
        %580 = vmatmul.bf16.gmra.mxu0 %v501
        %v581 = vpop.f32.mrf.mxu0
        %v582 = vadd.f32 0.0, %v581
        %v583 = vpop.f32.mrf.mxu0
        %v584 = vadd.f32 0.0, %v583
        %585 = vmatmul.bf16.gmra.mxu0 %v504
        %v586 = vpop.f32.mrf.mxu0
        %v587 = vadd.f32 0.0, %v586
        %v588 = vpop.f32.mrf.mxu0
        %v589 = vadd.f32 0.0, %v588
        %590 = vmatmul.bf16.gmra.mxu0 %v507
        %v591 = vpop.f32.mrf.mxu0
        %v592 = vadd.f32 0.0, %v591
        %v593 = vpop.f32.mrf.mxu0
        %594 = vdwg.mxu0
        %v595 = vpack.c.bf16 %v574, %v572
        %v596 = vpack.c.bf16 %v579, %v577
        %v597 = vpack.c.bf16 %v584, %v582
        %v598 = vpack.c.bf16 %v589, %v587
        %v599 = vpack.c.bf16 %v592, %v592
        %s600 = scalar_lea.vmem %s0, 16
        %v601 = vld [vmem:[%s600] sm:$0xf]
        %v602 = vld [vmem:[%s600 + $0x4] sm:$0xf]
        %v603 = vld [vmem:[%s600 + $0x8] sm:$0xf]
        %v604 = vld [vmem:[%s600 + $0xc] sm:$0xf]
        %v609 = vunpack.c.l.b16 %v601
        %v610 = vunpack.c.l.b16 %v602
        %v611 = vunpack.c.l.b16 %v603
        %v612 = vunpack.c.l.b16 %v604
        %v613 = vpack.c.b16 %v610, %v609
        %v614 = vpack.c.b16 %v612, %v611
        %vm615 = vcmask 588800
        %v617 = vsel %vm615, %v613, 0
        %v620 = vsel %vm615, %v614, 0
        %vm622 = vcmask 1043456
        %v624 = vsel %vm622, %v599, 0
        %626 = vmatpush.bf16.msra.mxu0 0
        %627 = vmatpush.bf16.msra.mxu0 0
        %628 = vmatpush.bf16.msra.mxu0 0
        %629 = vmatpush.bf16.msra.mxu0 %v624
        %630 = vmatpush.bf16.msra.mxu0 %v598
        %631 = vmatpush.bf16.msra.mxu0 %v597
        %632 = vmatpush.bf16.msra.mxu0 %v596
        %633 = vmatpush.bf16.msra.mxu0 %v595
        %634 = vmatmul.bf16.gmra.mxu0 %v617
        %v635 = vpop.f32.mrf.mxu0
        %v636 = vadd.f32 0.0, %v635
        %v637 = vpop.f32.mrf.mxu0
        %v638 = vadd.f32 0.0, %v637
        %639 = vmatmul.bf16.gmra.mxu0 %v620
        %v640 = vpop.f32.mrf.mxu0
        %v641 = vadd.f32 0.0, %v640
        %v642 = vpop.f32.mrf.mxu0
        %v643 = vadd.f32 0.0, %v642
        %644 = vdwg.mxu0
        %v649 = vunpack.c.l.b16 %v547
        %v650 = vunpack.c.l.b16 %v548
        %v651 = vunpack.c.l.b16 %v549
        %v652 = vunpack.c.l.b16 %v550
        %v653 = vpack.c.b16 %v650, %v649
        %v654 = vpack.c.b16 %v652, %v651
        %v656 = vsel %vm615, %v653, 0
        %v659 = vsel %vm615, %v654, 0
        %v662 = vsel %vm622, %v546, 0
        %664 = vmatpush.bf16.msra.mxu0 0
        %665 = vmatpush.bf16.msra.mxu0 0
        %666 = vmatpush.bf16.msra.mxu0 0
        %667 = vmatpush.bf16.msra.mxu0 %v662
        %668 = vmatpush.bf16.msra.mxu0 %v545
        %669 = vmatpush.bf16.msra.mxu0 %v544
        %670 = vmatpush.bf16.msra.mxu0 %v543
        %671 = vmatpush.bf16.msra.mxu0 %v542
        %672 = vmatmul.bf16.gmra.mxu0 %v656
        %v673 = vpop.f32.mrf.mxu0
        %v674 = vadd.f32 %v636, %v673
        %v675 = vpop.f32.mrf.mxu0
        %v676 = vadd.f32 %v638, %v675
        %677 = vmatmul.bf16.gmra.mxu0 %v659
        %v678 = vpop.f32.mrf.mxu0
        %v679 = vadd.f32 %v641, %v678
        %v680 = vpop.f32.mrf.mxu0
        %v681 = vadd.f32 %v643, %v680
        %682 = vdwg.mxu0
        %v683 = vadd.s32 %v457, 1
        %vm684 = vcmp.eq.s32.totalorder %v450, %v683
        %vm685 = vcmp.eq.s32.totalorder %v451, %v683
        %vm686 = vcmp.ge.s32.totalorder %v683, 0
        %vm687 = vmand %vm684, %vm686
        %vm688 = vmand %vm685, %vm686
        %vm689 = vcmp.lt.s32.totalorder %v683, 16
        %vm690 = vmand %vm687, %vm689
        %vm691 = vmand %vm688, %vm689
        %v692 = vsel %vm690, 1.0, 0.0
        %v693 = vsel %vm691, 1.0, 0.0
        %v694 = vpack.c.bf16 %v693, %v692
        %695 = vmatpush.bf16.msra.mxu0 0
        %696 = vmatpush.bf16.msra.mxu0 0
        %697 = vmatpush.bf16.msra.mxu0 0
        %698 = vmatpush.bf16.msra.mxu0 0
        %699 = vmatpush.bf16.msra.mxu0 0
        %700 = vmatpush.bf16.msra.mxu0 0
        %701 = vmatpush.bf16.msra.mxu0 0
        %702 = vmatpush.bf16.msra.mxu0 %v694
        %703 = vmatmul.bf16.gmra.mxu0 %v495
        %v704 = vpop.f32.mrf.mxu0
        %v705 = vadd.f32 0.0, %v704
        %v706 = vpop.f32.mrf.mxu0
        %v707 = vadd.f32 0.0, %v706
        %708 = vmatmul.bf16.gmra.mxu0 %v498
        %v709 = vpop.f32.mrf.mxu0
        %v710 = vadd.f32 0.0, %v709
        %v711 = vpop.f32.mrf.mxu0
        %v712 = vadd.f32 0.0, %v711
        %713 = vmatmul.bf16.gmra.mxu0 %v501
        %v714 = vpop.f32.mrf.mxu0
        %v715 = vadd.f32 0.0, %v714
        %v716 = vpop.f32.mrf.mxu0
        %v717 = vadd.f32 0.0, %v716
        %718 = vmatmul.bf16.gmra.mxu0 %v504
        %v719 = vpop.f32.mrf.mxu0
        %v720 = vadd.f32 0.0, %v719
        %v721 = vpop.f32.mrf.mxu0
        %v722 = vadd.f32 0.0, %v721
        %723 = vmatmul.bf16.gmra.mxu0 %v507
        %v724 = vpop.f32.mrf.mxu0
        %v725 = vadd.f32 0.0, %v724
        %v726 = vpop.f32.mrf.mxu0
        %727 = vdwg.mxu0
        %v728 = vpack.c.bf16 %v707, %v705
        %v729 = vpack.c.bf16 %v712, %v710
        %v730 = vpack.c.bf16 %v717, %v715
        %v731 = vpack.c.bf16 %v722, %v720
        %v732 = vpack.c.bf16 %v725, %v725
        %s733 = scalar_lea.vmem %s0, 32
        %v734 = vld [vmem:[%s733] sm:$0xf]
        %v735 = vld [vmem:[%s733 + $0x4] sm:$0xf]
        %v736 = vld [vmem:[%s733 + $0x8] sm:$0xf]
        %v737 = vld [vmem:[%s733 + $0xc] sm:$0xf]
        %v742 = vunpack.c.l.b16 %v734
        %v743 = vunpack.c.l.b16 %v735
        %v744 = vunpack.c.l.b16 %v736
        %v745 = vunpack.c.l.b16 %v737
        %v746 = vpack.c.b16 %v743, %v742
        %v747 = vpack.c.b16 %v745, %v744
        %v749 = vsel %vm615, %v746, 0
        %v752 = vsel %vm615, %v747, 0
        %v755 = vsel %vm622, %v732, 0
        %757 = vmatpush.bf16.msra.mxu0 0
        %758 = vmatpush.bf16.msra.mxu0 0
        %759 = vmatpush.bf16.msra.mxu0 0
        %760 = vmatpush.bf16.msra.mxu0 %v755
        %761 = vmatpush.bf16.msra.mxu0 %v731
        %762 = vmatpush.bf16.msra.mxu0 %v730
        %763 = vmatpush.bf16.msra.mxu0 %v729
        %764 = vmatpush.bf16.msra.mxu0 %v728
        %765 = vmatmul.bf16.gmra.mxu0 %v749
        %v766 = vpop.f32.mrf.mxu0
        %v767 = vadd.f32 0.0, %v766
        %v768 = vpop.f32.mrf.mxu0
        %v769 = vadd.f32 0.0, %v768
        %770 = vmatmul.bf16.gmra.mxu0 %v752
        %v771 = vpop.f32.mrf.mxu0
        %v772 = vadd.f32 0.0, %v771
        %v773 = vpop.f32.mrf.mxu0
        %v774 = vadd.f32 0.0, %v773
        %775 = vdwg.mxu0
        %v776 = vadd.f32 %v674, %v767
        %v777 = vadd.f32 %v676, %v769
        %v778 = vadd.f32 %v679, %v772
        %v779 = vadd.f32 %v681, %v774
        %vm780 = vcmask 64512
        %781 = vst.msk [vmem:[%s150] sm:$0xff] %vm780, %v776
        %783 = vrot.lane.b32.xlu0 %v776, 120
        %v784 = vpop.permute.xlu0 %783
        %s786 = scalar_lea.vmem %s150, 8 [#allocation3]
        %787 = vst.msk [vmem:[%s786] sm:$0xff] %vm780, %v784
        %s788 = scalar_lea.vmem %s150, 16 [#allocation3]
        %789 = vst.msk [vmem:[%s788] sm:$0xff] %vm780, %v777
        %791 = vrot.lane.b32.xlu0 %v777, 120
        %v792 = vpop.permute.xlu0 %791
        %s794 = scalar_lea.vmem %s150, 24 [#allocation3]
        %795 = vst.msk [vmem:[%s794] sm:$0xff] %vm780, %v792
        %s796 = scalar_lea.vmem %s150, 32 [#allocation3]
        %797 = vst.msk [vmem:[%s796] sm:$0xff] %vm780, %v778
        %799 = vrot.lane.b32.xlu0 %v778, 120
        %v800 = vpop.permute.xlu0 %799
        %s802 = scalar_lea.vmem %s150, 40 [#allocation3]
        %803 = vst.msk [vmem:[%s802] sm:$0xff] %vm780, %v800
        %s804 = scalar_lea.vmem %s150, 48 [#allocation3]
        %805 = vst.msk [vmem:[%s804] sm:$0xff] %vm780, %v779
        %807 = vrot.lane.b32.xlu0 %v779, 120
        %v808 = vpop.permute.xlu0 %807
        %s810 = scalar_lea.vmem %s150, 56 [#allocation3]
        %811 = vst.msk [vmem:[%s810] sm:$0xff] %vm780, %v808
        %s812 = sand.u32 %s85, 1
        %s813 = scalar_lea.sflag [#allocation4], %s812
        %s814 = sand.u32 %s85, 1
        %s815 = smul.addr %s814, 64
        %s816 = scalar_lea.vmem [#allocation3], %s815
        // Predicated region
        $region29: #{downsample_forward.1} parent=27 // pred_check
          %p817 = pneg %p95
        $region30: #{downsample_forward.1} parent=27 // pred_check_branch
          %819 = sbr.rel (%p817) target = $region32
        $region31: #{downsample_forward.1} parent=27 // pred_region
          %821 = vsyncadd %s813, 0
          %s822 = smul.addr %s20, 8
          %s823 = sadd.s32 %s21, %s822
          %s824 = smul.addr %s823, 8
          %s825 = scalar_lea.hbm %s2, %s824
          %s826 = sshll.u32 %s816, 4
          %s827 = int_to_ptr.vmem [resolvable:$true] %s826
          %s828 = sshll.u32 %s825, 4
          %s829 = int_to_ptr.hbm [resolvable:$true] %s828
          %834 = dma.vmem_to_hbm [thread:$0]  %s827, 1024, %s829, %s813, 128, 128, 8
        $region32: #{downsample_forward.1} parent=27 // pred_fallthru
          _
      $region28: #{downsample_forward.1} parent=5 // pred_fallthru
        _
      %p835 = scmp.le.s32.totalorder 2, %s11
      // Predicated region
      $region33: #{downsample_forward.1} parent=5 // pred_check
        %p836 = pneg %p835
      $region34: #{downsample_forward.1} parent=5 // pred_check_branch
        %838 = sbr.rel (%p836) target = $region36
      $region35: #{downsample_forward.1} parent=5 // pred_region
        %s839 = ssub.s32 %s11, 2
        // Predicated region
        $region37: #{downsample_forward.1} parent=35 // pred_check
          %p840 = pneg %p101
        $region38: #{downsample_forward.1} parent=35 // pred_check_branch
          %842 = sbr.rel (%p840) target = $region40
        $region39: #{downsample_forward.1} parent=35 // pred_region
          %s843 = sand.u32 %s86, 1
          %s844 = scalar_lea.sflag [#allocation4], %s843
          %s845 = sand.u32 %s86, 1
          %s846 = smul.addr %s845, 64
          %s847 = scalar_lea.vmem [#allocation3], %s846
          %849 = dma.done %s844, 1024
        $region40: #{downsample_forward.1} parent=35 // pred_fallthru
          _
      $region36: #{downsample_forward.1} parent=5 // pred_fallthru
        _
    $region6: #{downsample_forward.1} parent=1 // loop_footer
      %s15 = sadd.s32 1, %s11
    $region7: #{downsample_forward.1} parent=1 // loop_footer_branch
      %10 = sbr.rel target = $region3
    $region8: #{downsample_forward.1} parent=1 // loop_exit
      _
    %850 = vsyncpa [#allocation4], 1
    %s851 = scalar_lea.sflag [#allocation4], 1
    %852 = vsyncpa %s851, 1

</llo_original>
